<compile_context>
chip_gen: v7x
topology: tpu7x:2x2x1
jax: 0.10.0
libtpu: 0.0.40
codegen_flags: <defaults>
</compile_context>

<pallas_src>
import functools

import jax
import jax.numpy as jnp
from jax.experimental import pallas as pl
from jax.experimental.pallas import tpu as pltpu


# ----------------------------------------------------------------------------
# Generation-aware VMEM budgets.
#   v5e / v6e: 128 MiB physical VMEM -> large budget keeps the full-K path.
#   v7x:        64 MiB physical VMEM -> conservative budget + lower limit.
# ----------------------------------------------------------------------------
def _vmem_budgets():
    try:
        cap = pltpu.get_tpu_info().vmem_capacity_bytes
    except Exception:  # unknown chip / emulator -> be conservative
        cap = 64 * 1024 * 1024
    if cap >= 100 * 1024 * 1024:                       # v5e / v6e
        return 80 * 1024 * 1024, 96 * 1024 * 1024
    return 28 * 1024 * 1024, 40 * 1024 * 1024          # v7x


_VMEM_BUDGET, _VMEM_LIMIT = _vmem_budgets()


def _round_up(x, m):
    return (x + m - 1) // m * m


def _choose_row_tile(num_nodes):
    """Row-strip size used for ALL node-dim tiling.  Prefer big strips (lower
    per-grid-step overhead), but keep >= 2 programs on the parallel axis when
    possible so v7x's two TensorCores both get work."""
    for t in (512, 256):
        if _round_up(num_nodes, t) // t >= 2:
            return t
    return 128


def _pad_cast(x, rows, cols, dtype):
    """Zero-pad x to (rows, cols) and cast; no-op if already padded + typed."""
    if x.shape == (rows, cols) and x.dtype == dtype:
        return x
    out = jnp.zeros((rows, cols), dtype)
    return out.at[: x.shape[0], : x.shape[1]].set(x.astype(dtype))


# ----------------------------------------------------------------------------
# Pallas kernel 1: out = maybe_relu(row_scale ⊙ (A @ B) + bias)
#   bf16 operands, f32 MXU accumulation, row-scale/bias/relu fused in epilogue.
# ----------------------------------------------------------------------------
def _mm_fullk_kernel(a_ref, b_ref, scale_ref, bias_ref, o_ref, *, relu):
    acc = jnp.dot(a_ref[...], b_ref[...], preferred_element_type=jnp.float32)
    acc = acc * scale_ref[...] + bias_ref[...]
    if relu:
        acc = jnp.maximum(acc, 0.0)
    o_ref[...] = acc.astype(o_ref.dtype)


def _mm_kloop_kernel(a_ref, b_ref, scale_ref, bias_ref, o_ref, acc_ref, *, relu):
    @pl.when(pl.program_id(2) == 0)
    def _():
        acc_ref[...] = jnp.zeros_like(acc_ref)

    acc_ref[...] += jnp.dot(
        a_ref[...], b_ref[...], preferred_element_type=jnp.float32)

    @pl.when(pl.program_id(2) == pl.num_programs(2) - 1)
    def _():
        r = acc_ref[...] * scale_ref[...] + bias_ref[...]
        if relu:
            r = jnp.maximum(r, 0.0)
        o_ref[...] = r.astype(o_ref.dtype)


def matmul_scale_bias(a_p, b_p, scale_p, bias_p, *, relu=False,
                      out_dtype=jnp.float32, row_tile=128):
    """All operands pre-padded (no hidden repack):
       a_p (Mp, Kp) bf16, b_p (Kp, Np) bf16, scale_p (Mp, 1) f32, bias_p (1, Np) f32.
       Mp % row_tile == 0; Kp, Np multiples of 128.  Returns padded (Mp, Np)."""
    Mp, Kp = a_p.shape
    Kp2, Np_ = b_p.shape
    assert Kp == Kp2 and Mp % row_tile == 0
    tm = row_tile
    # Memory-bound kernels: do not chase MXU width; 256 only if it divides.
    tn = 256 if Np_ % 256 == 0 else 128

    # Double-buffered bf16 inputs + double-buffered output + scale/bias + slack.
    fullk_bytes = (2 * 2 * (tm * Kp + Kp * tn) + 2 * 4 * tm * tn
                   + 4 * (Mp + Np_) + (1 << 16))

    if fullk_bytes <= _VMEM_BUDGET:
        return pl.pallas_call(
            functools.partial(_mm_fullk_kernel, relu=relu),
            out_shape=jax.ShapeDtypeStruct((Mp, Np_), out_dtype),
            grid=(Mp // tm, Np_ // tn),
            in_specs=[
                pl.BlockSpec((tm, Kp), lambda i, j: (i, 0)),
                pl.BlockSpec((Kp, tn), lambda i, j: (0, j)),
                pl.BlockSpec((tm, 1), lambda i, j: (i, 0)),
                pl.BlockSpec((1, tn), lambda i, j: (0, j)),
            ],
            out_specs=pl.BlockSpec((tm, tn), lambda i, j: (i, j)),
            compiler_params=pltpu.CompilerParams(
                dimension_semantics=("parallel", "parallel"),
                vmem_limit_bytes=_VMEM_LIMIT),
        )(a_p, b_p, scale_p, bias_p)

    # Fallback: K-loop accumulator path (only for very wide feature dims).
    tk = 512 if Kp % 512 == 0 else (256 if Kp % 256 == 0 else 128)
    return pl.pallas_call(
        functools.partial(_mm_kloop_kernel, relu=relu),
        out_shape=jax.ShapeDtypeStruct((Mp, Np_), out_dtype),
        grid=(Mp // tm, Np_ // tn, Kp // tk),
        in_specs=[
            pl.BlockSpec((tm, tk), lambda i, j, k: (i, k)),
            pl.BlockSpec((tk, tn), lambda i, j, k: (k, j)),
            pl.BlockSpec((tm, 1), lambda i, j, k: (i, 0)),
            pl.BlockSpec((1, tn), lambda i, j, k: (0, j)),
        ],
        out_specs=pl.BlockSpec((tm, tn), lambda i, j, k: (i, j)),
        scratch_shapes=[pltpu.VMEM((tm, tn), jnp.float32)],
        compiler_params=pltpu.CompilerParams(
            dimension_semantics=("parallel", "parallel", "arbitrary"),
            vmem_limit_bytes=_VMEM_LIMIT),
    )(a_p, b_p, scale_p, bias_p)


# ----------------------------------------------------------------------------
# Pallas kernel 2: post-aggregation epilogue  out = maybe_relu(dinv ⊙ S + bias)
#   (relu + dtype cast fused; used to emit the bf16 conv2-input half directly).
# ----------------------------------------------------------------------------
def _scale_bias_act_kernel(s_ref, scale_ref, bias_ref, o_ref, *, relu):
    r = s_ref[...] * scale_ref[...] + bias_ref[...]
    if relu:
        r = jnp.maximum(r, 0.0)
    o_ref[...] = r.astype(o_ref.dtype)


def scale_bias_act(s_p, scale_p, bias_p, *, relu, out_dtype, row_tile):
    Mp, Fp = s_p.shape
    tm = row_tile
    return pl.pallas_call(
        functools.partial(_scale_bias_act_kernel, relu=relu),
        out_shape=jax.ShapeDtypeStruct((Mp, Fp), out_dtype),
        grid=(Mp // tm,),
        in_specs=[
            pl.BlockSpec((tm, Fp), lambda i: (i, 0)),
            pl.BlockSpec((tm, 1), lambda i: (i, 0)),
            pl.BlockSpec((1, Fp), lambda i: (0, 0)),
        ],
        out_specs=pl.BlockSpec((tm, Fp), lambda i: (i, 0)),
        compiler_params=pltpu.CompilerParams(
            dimension_semantics=("parallel",),
            vmem_limit_bytes=_VMEM_LIMIT),
    )(s_p, scale_p, bias_p)


# ----------------------------------------------------------------------------
# Sparse GCNConv:  out = D^-1/2 (A + I) D^-1/2 (X @ W) + b   (PyG semantics).
# ----------------------------------------------------------------------------
def gcn_conv_sparse(x_p, w_p, bias_p, dinv_p, src, dst, *, relu, out_dtype,
                    row_tile):
    """x_p (Mp, Kp) bf16, w_p (Kp, Fp) bf16, bias_p (1, Fp) f32,
    dinv_p (Mp, 1) f32 (zeros in padded rows).  Returns (out_padded, agg)
    where agg = (A+I) @ (dinv ⊙ X W) is the pre-scale/pre-bias buffer."""
    zero_bias = jnp.zeros_like(bias_p)
    # H' = dinv ⊙ (X @ W)  -- normalization folded into the matmul epilogue.
    h_scaled = matmul_scale_bias(x_p, w_p, dinv_p, zero_bias, relu=False,
                                 out_dtype=jnp.float32, row_tile=row_tile)
    # (A + I) @ H'  via edge gather + segment_sum: O(E*F) instead of O(N^2*F).
    # TODO(synk): optional scalar-prefetch Pallas gather/segment kernel here.
    msgs = h_scaled[src]
    agg = jax.ops.segment_sum(msgs, dst, num_segments=h_scaled.shape[0]) + h_scaled
    # out = maybe_relu(dinv ⊙ agg + b)  (fused Pallas epilogue, casts to out_dtype)
    out = scale_bias_act(agg, dinv_p, bias_p, relu=relu, out_dtype=out_dtype,
                         row_tile=row_tile)
    return out, agg


# ----------------------------------------------------------------------------
# BUrumorGCN forward (eval mode).  num_graphs is static -> whole thing jits.
# ----------------------------------------------------------------------------
@functools.partial(jax.jit, static_argnames=("num_graphs",))
def bu_rumor_gcn_forward(params, x, bu_edge_index, batch, root_index, num_graphs):
    n = x.shape[0]
    in_feats = x.shape[1]
    hid_feats = params["w1"].shape[1]
    out_feats = params["w2"].shape[1]

    row_tile = _choose_row_tile(n)
    mp = _round_up(n, row_tile)           # rows padded to a multiple of the tile
    kp1 = _round_up(in_feats, 128)
    hp = _round_up(hid_feats, 128)
    kp2 = _round_up(hid_feats + in_feats, 128)
    op = _round_up(out_feats, 128)

    src, dst = bu_edge_index[0], bu_edge_index[1]

    # GCN symmetric normalization in O(E) (no dense matrix, no N^2 passes).
    deg = 1.0 + jax.ops.segment_sum(
        jnp.ones(src.shape, jnp.float32), dst, num_segments=n)
    dinv = jax.lax.rsqrt(deg)                                   # deg >= 1
    dinv_p = jnp.zeros((mp, 1), jnp.float32).at[:n, 0].set(dinv)

    x1 = x.astype(jnp.float32)

    # ---- conv1 -------------------------------------------------------------
    x_p = _pad_cast(x1, mp, kp1, jnp.bfloat16)
    w1_p = _pad_cast(params["w1"], kp1, hp, jnp.bfloat16)
    b1_p = _pad_cast(params["b1"].reshape(1, -1), 1, hp, jnp.float32)
    # relu + bf16 cast fused in the epilogue kernel (feeds the conv2 slab).
    h1_relu_bf16, agg1 = gcn_conv_sparse(
        x_p, w1_p, b1_p, dinv_p, src, dst,
        relu=True, out_dtype=jnp.bfloat16, row_tile=row_tile)

    # Pre-ReLU conv1 output (x2) only needed at root rows -> recompute cheaply.
    x2_roots = (dinv[root_index][:, None]
                * agg1[root_index, :hid_feats] + params["b1"])   # (B, hid)
    root_extend2 = x2_roots[batch]                               # (n, hid)

    # root_extend1 = x1[root_index[batch]]  (single fused gather)
    root_extend1 = x1[root_index[batch]]                         # (n, in)

    # ---- conv2 input slab: lane-dense, padded, bf16, built once -------------
    slab = jnp.zeros((mp, kp2), jnp.bfloat16)
    slab = slab.at[:n, :hid_feats].set(h1_relu_bf16[:n, :hid_feats])
    slab = slab.at[:n, hid_feats:hid_feats + in_feats].set(
        jnp.maximum(root_extend1, 0.0).astype(jnp.bfloat16))
    # TODO(synk): F.dropout with training=True not modeled; eval mode => identity.

    # ---- conv2 -------------------------------------------------------------
    w2_p = _pad_cast(params["w2"], kp2, op, jnp.bfloat16)
    b2_p = _pad_cast(params["b2"].reshape(1, -1), 1, op, jnp.float32)
    h2_p, _ = gcn_conv_sparse(
        slab, w2_p, b2_p, dinv_p, src, dst,
        relu=True, out_dtype=jnp.float32, row_tile=row_tile)     # conv2 + fused ReLU

    h_final = jnp.concatenate(
        (h2_p[:n, :out_feats], root_extend2), axis=1)            # (n, out+hid)

    # scatter_mean over batch: segmented sums (no dense (B, N) matmul).
    sums = jax.ops.segment_sum(h_final, batch, num_segments=num_graphs)
    counts = jax.ops.segment_sum(
        jnp.ones((n,), jnp.float32), batch, num_segments=num_graphs)
    return sums / jnp.maximum(counts, 1.0)[:, None]


# ----------------------------------------------------------------------------
# Deterministic parameter init + example inputs.
# ----------------------------------------------------------------------------
def init_params(key, in_feats, hid_feats, out_feats):
    k1, k2, k3, k4 = jax.random.split(key, 4)
    scale1 = 1.0 / jnp.sqrt(jnp.float32(in_feats))
    scale2 = 1.0 / jnp.sqrt(jnp.float32(hid_feats + in_feats))
    return {
        "w1": jax.random.normal(k1, (in_feats, hid_feats), jnp.float32) * scale1,
        "b1": jax.random.normal(k2, (hid_feats,), jnp.float32) * 0.01,
        "w2": jax.random.normal(k3, (hid_feats + in_feats, out_feats), jnp.float32)
        * scale2,
        "b2": jax.random.normal(k4, (out_feats,), jnp.float32) * 0.01,
    }


if __name__ == "__main__":
    in_feats, hid_feats, out_feats = 16, 32, 16
    num_nodes = 8     # two graphs of 4 nodes each
    num_graphs = 2    # static

    key = jax.random.PRNGKey(0)
    kx, kp = jax.random.split(key)
    x = jax.random.normal(kx, (num_nodes, in_feats), jnp.float32)

    # Two bottom-up trees: graph 0 = {0(root),1,2,3}, graph 1 = {4(root),5,6,7}
    # BU edges point child -> parent.
    bu_edge_index = jnp.array(
        [[1, 2, 3, 5, 6, 7],   # src
         [0, 0, 1, 4, 4, 5]],  # dst
        dtype=jnp.int32,
    )
    batch = jnp.array([0, 0, 0, 0, 1, 1, 1, 1], dtype=jnp.int32)
    root_index = jnp.array([0, 4], dtype=jnp.int32)

    params = init_params(kp, in_feats, hid_feats, out_feats)

    out = bu_rumor_gcn_forward(params, x, bu_edge_index, batch, root_index,
                               num_graphs=num_graphs)
    out = jax.block_until_ready(out)

    assert out.shape == (num_graphs, out_feats + hid_feats)
    assert jnp.all(jnp.isfinite(out))
    print("KERNEL_OK")
</pallas_src>

<mosaic_0001>
module attributes {stable_mosaic.version = 11 : i64} {
  func.func @_mm_fullk_kernel(%arg0: i32, %arg1: i32, %arg2: memref<128x128xbf16, #tpu.memory_space<vmem>>, %arg3: memref<128x128xbf16, #tpu.memory_space<vmem>>, %arg4: memref<128x1xf32, #tpu.memory_space<vmem>>, %arg5: memref<1x128xf32, #tpu.memory_space<vmem>>, %arg6: memref<128x128xf32, #tpu.memory_space<vmem>>) attributes {dimension_semantics = [#tpu.dimension_semantics<parallel>, #tpu.dimension_semantics<parallel>], iteration_bounds = array<i64: 1, 1>, scalar_prefetch = 0 : i64, scratch_operands = 0 : i64, tpu.core_type = #tpu.core_type<tc>, window_params = [{transform_indices = @transform_0, window_bounds = array<i64: 128, 128>}, {transform_indices = @transform_1, window_bounds = array<i64: 128, 128>}, {transform_indices = @transform_2, window_bounds = array<i64: 128, 1>}, {transform_indices = @transform_3, window_bounds = array<i64: 1, 128>}, {transform_indices = @transform_4, window_bounds = array<i64: 128, 128>}]} {
    %c0 = arith.constant 0 : index
    %c0_0 = arith.constant 0 : index
    %0 = vector.load %arg2[%c0, %c0_0] : memref<128x128xbf16, #tpu.memory_space<vmem>>, vector<128x128xbf16>
    %c0_1 = arith.constant 0 : index
    %c0_2 = arith.constant 0 : index
    %1 = vector.load %arg3[%c0_1, %c0_2] : memref<128x128xbf16, #tpu.memory_space<vmem>>, vector<128x128xbf16>
    %cst = arith.constant dense<0.000000e+00> : vector<128x128xf32>
    %2 = tpu.matmul %0, %1, %cst {dimension_numbers = #tpu.dot_dimension_numbers<[1], [0], [0], [1], [0, 0, 1, 1], [], []>} : vector<128x128xbf16>, vector<128x128xbf16>, vector<128x128xf32> -> vector<128x128xf32>
    %c0_3 = arith.constant 0 : index
    %c0_4 = arith.constant 0 : index
    %3 = vector.load %arg4[%c0_3, %c0_4] : memref<128x1xf32, #tpu.memory_space<vmem>>, vector<128x1xf32>
    %4 = vector.broadcast %3 : vector<128x1xf32> to vector<128x128xf32>
    %5 = arith.mulf %2, %4 : vector<128x128xf32>
    %c0_5 = arith.constant 0 : index
    %c0_6 = arith.constant 0 : index
    %6 = vector.load %arg5[%c0_5, %c0_6] : memref<1x128xf32, #tpu.memory_space<vmem>>, vector<1x128xf32>
    %7 = vector.broadcast %6 : vector<1x128xf32> to vector<128x128xf32>
    %8 = arith.addf %5, %7 : vector<128x128xf32>
    %c0_7 = arith.constant 0 : index
    %c0_8 = arith.constant 0 : index
    %9 = vector.load %arg6[%c0_7, %c0_8] : memref<128x128xf32, #tpu.memory_space<vmem>>, vector<128x128xf32>
    tpu.vector_store %arg6[%c0_7, %c0_8], %8 {strides = array<i32>} : memref<128x128xf32, #tpu.memory_space<vmem>>, vector<128x128xf32>,
    return
  }
  func.func @transform_0(%arg0: i32, %arg1: i32) -> (i32, i32) {
    %c0_i32 = arith.constant 0 : i32
    %c0_i32_0 = arith.constant 0 : i32
    return %arg0, %c0_i32 : i32, i32
  }
  func.func @transform_1(%arg0: i32, %arg1: i32) -> (i32, i32) {
    %c0_i32 = arith.constant 0 : i32
    %c0_i32_0 = arith.constant 0 : i32
    return %c0_i32, %arg1 : i32, i32
  }
  func.func @transform_2(%arg0: i32, %arg1: i32) -> (i32, i32) {
    %c0_i32 = arith.constant 0 : i32
    %c0_i32_0 = arith.constant 0 : i32
    return %arg0, %c0_i32 : i32, i32
  }
  func.func @transform_3(%arg0: i32, %arg1: i32) -> (i32, i32) {
    %c0_i32 = arith.constant 0 : i32
    %c0_i32_0 = arith.constant 0 : i32
    return %c0_i32, %arg1 : i32, i32
  }
  func.func @transform_4(%arg0: i32, %arg1: i32) -> (i32, i32) {
    %c0_i32 = arith.constant 0 : i32
    return %arg0, %arg1 : i32, i32
  }
}

module attributes {stable_mosaic.version = 11 : i64} {
  func.func @_scale_bias_act_kernel(%arg0: i32, %arg1: memref<128x128xf32, #tpu.memory_space<vmem>>, %arg2: memref<128x1xf32, #tpu.memory_space<vmem>>, %arg3: memref<1x128xf32, #tpu.memory_space<vmem>>, %arg4: memref<128x128xbf16, #tpu.memory_space<vmem>>) attributes {dimension_semantics = [#tpu.dimension_semantics<parallel>], iteration_bounds = array<i64: 1>, scalar_prefetch = 0 : i64, scratch_operands = 0 : i64, tpu.core_type = #tpu.core_type<tc>, window_params = [{transform_indices = @transform_0, window_bounds = array<i64: 128, 128>}, {transform_indices = @transform_1, window_bounds = array<i64: 128, 1>}, {pipeline_mode = #tpu.pipeline_mode<synchronous>, transform_indices = @transform_2, window_bounds = array<i64: 1, 128>}, {transform_indices = @transform_3, window_bounds = array<i64: 128, 128>}]} {
    %c0 = arith.constant 0 : index
    %c0_0 = arith.constant 0 : index
    %0 = vector.load %arg1[%c0, %c0_0] : memref<128x128xf32, #tpu.memory_space<vmem>>, vector<128x128xf32>
    %c0_1 = arith.constant 0 : index
    %c0_2 = arith.constant 0 : index
    %1 = vector.load %arg2[%c0_1, %c0_2] : memref<128x1xf32, #tpu.memory_space<vmem>>, vector<128x1xf32>
    %2 = vector.broadcast %1 : vector<128x1xf32> to vector<128x128xf32>
    %3 = arith.mulf %0, %2 : vector<128x128xf32>
    %c0_3 = arith.constant 0 : index
    %c0_4 = arith.constant 0 : index
    %4 = vector.load %arg3[%c0_3, %c0_4] : memref<1x128xf32, #tpu.memory_space<vmem>>, vector<1x128xf32>
    %5 = vector.broadcast %4 : vector<1x128xf32> to vector<128x128xf32>
    %6 = arith.addf %3, %5 : vector<128x128xf32>
    %cst = arith.constant 0.000000e+00 : f32
    %7 = vector.broadcast %cst : f32 to vector<128x128xf32>
    %8 = arith.maximumf %6, %7 : vector<128x128xf32>
    %9 = arith.truncf %8 : vector<128x128xf32> to vector<128x128xbf16>
    %c0_5 = arith.constant 0 : index
    %c0_6 = arith.constant 0 : index
    %10 = vector.load %arg4[%c0_5, %c0_6] : memref<128x128xbf16, #tpu.memory_space<vmem>>, vector<128x128xbf16>
    tpu.vector_store %arg4[%c0_5, %c0_6], %9 {strides = array<i32>} : memref<128x128xbf16, #tpu.memory_space<vmem>>, vector<128x128xbf16>,
    return
  }
  func.func @transform_0(%arg0: i32) -> (i32, i32) {
    %c0_i32 = arith.constant 0 : i32
    %c0_i32_0 = arith.constant 0 : i32
    return %arg0, %c0_i32 : i32, i32
  }
  func.func @transform_1(%arg0: i32) -> (i32, i32) {
    %c0_i32 = arith.constant 0 : i32
    %c0_i32_0 = arith.constant 0 : i32
    return %arg0, %c0_i32 : i32, i32
  }
  func.func @transform_2(%arg0: i32) -> (i32, i32) {
    %c0_i32 = arith.constant 0 : i32
    %c0_i32_0 = arith.constant 0 : i32
    %c0_i32_1 = arith.constant 0 : i32
    return %c0_i32, %c0_i32_0 : i32, i32
  }
  func.func @transform_3(%arg0: i32) -> (i32, i32) {
    %c0_i32 = arith.constant 0 : i32
    %c0_i32_0 = arith.constant 0 : i32
    return %arg0, %c0_i32 : i32, i32
  }
}

module attributes {stable_mosaic.version = 11 : i64} {
  func.func @_scale_bias_act_kernel(%arg0: i32, %arg1: memref<128x128xf32, #tpu.memory_space<vmem>>, %arg2: memref<128x1xf32, #tpu.memory_space<vmem>>, %arg3: memref<1x128xf32, #tpu.memory_space<vmem>>, %arg4: memref<128x128xf32, #tpu.memory_space<vmem>>) attributes {dimension_semantics = [#tpu.dimension_semantics<parallel>], iteration_bounds = array<i64: 1>, scalar_prefetch = 0 : i64, scratch_operands = 0 : i64, tpu.core_type = #tpu.core_type<tc>, window_params = [{transform_indices = @transform_0, window_bounds = array<i64: 128, 128>}, {transform_indices = @transform_1, window_bounds = array<i64: 128, 1>}, {pipeline_mode = #tpu.pipeline_mode<synchronous>, transform_indices = @transform_2, window_bounds = array<i64: 1, 128>}, {transform_indices = @transform_3, window_bounds = array<i64: 128, 128>}]} {
    %c0 = arith.constant 0 : index
    %c0_0 = arith.constant 0 : index
    %0 = vector.load %arg1[%c0, %c0_0] : memref<128x128xf32, #tpu.memory_space<vmem>>, vector<128x128xf32>
    %c0_1 = arith.constant 0 : index
    %c0_2 = arith.constant 0 : index
    %1 = vector.load %arg2[%c0_1, %c0_2] : memref<128x1xf32, #tpu.memory_space<vmem>>, vector<128x1xf32>
    %2 = vector.broadcast %1 : vector<128x1xf32> to vector<128x128xf32>
    %3 = arith.mulf %0, %2 : vector<128x128xf32>
    %c0_3 = arith.constant 0 : index
    %c0_4 = arith.constant 0 : index
    %4 = vector.load %arg3[%c0_3, %c0_4] : memref<1x128xf32, #tpu.memory_space<vmem>>, vector<1x128xf32>
    %5 = vector.broadcast %4 : vector<1x128xf32> to vector<128x128xf32>
    %6 = arith.addf %3, %5 : vector<128x128xf32>
    %cst = arith.constant 0.000000e+00 : f32
    %7 = vector.broadcast %cst : f32 to vector<128x128xf32>
    %8 = arith.maximumf %6, %7 : vector<128x128xf32>
    %c0_5 = arith.constant 0 : index
    %c0_6 = arith.constant 0 : index
    %9 = vector.load %arg4[%c0_5, %c0_6] : memref<128x128xf32, #tpu.memory_space<vmem>>, vector<128x128xf32>
    tpu.vector_store %arg4[%c0_5, %c0_6], %8 {strides = array<i32>} : memref<128x128xf32, #tpu.memory_space<vmem>>, vector<128x128xf32>,
    return
  }
  func.func @transform_0(%arg0: i32) -> (i32, i32) {
    %c0_i32 = arith.constant 0 : i32
    %c0_i32_0 = arith.constant 0 : i32
    return %arg0, %c0_i32 : i32, i32
  }
  func.func @transform_1(%arg0: i32) -> (i32, i32) {
    %c0_i32 = arith.constant 0 : i32
    %c0_i32_0 = arith.constant 0 : i32
    return %arg0, %c0_i32 : i32, i32
  }
  func.func @transform_2(%arg0: i32) -> (i32, i32) {
    %c0_i32 = arith.constant 0 : i32
    %c0_i32_0 = arith.constant 0 : i32
    %c0_i32_1 = arith.constant 0 : i32
    return %c0_i32, %c0_i32_0 : i32, i32
  }
  func.func @transform_3(%arg0: i32) -> (i32, i32) {
    %c0_i32 = arith.constant 0 : i32
    %c0_i32_0 = arith.constant 0 : i32
    return %arg0, %c0_i32 : i32, i32
  }
}

</mosaic_0001>

<llo_original>
// kernel: custom-call.12
$region0: #{custom-call.12}
  %s0 = inlined_call_operand.vmem [shape: f32[2,32], index: 0, kind: output, shape index: {}]

// kernel: bu_rumor_gcn_forward.4
$region0: #{bu_rumor_gcn_forward.4}
  #allocation0 [shape = 'u32[]', space=smem, size = 0x4, offset = 0x4, fixed_abs, tag = 'smem constant byte address 0x4 - core index']
  #allocation1 [shape = 'u32[144,128]{1,0:T(1,128)}', space=vmem, size = 0x12000, scoped, tag = 'internal scratch']
  %s0 = inlined_call_operand.vmem [shape: bf16[128,128], index: 0, kind: input, shape index: {}]
  %s1 = inlined_call_operand.vmem [shape: bf16[128,128], index: 1, kind: input, shape index: {}]
  %s2 = inlined_call_operand.vmem [shape: f32[128,1], index: 2, kind: input, shape index: {}]
  %s3 = inlined_call_operand.vmem [shape: f32[1,128], index: 3, kind: input, shape index: {}]
  %s4 = inlined_call_operand.vmem [shape: f32[128,128], index: 4, kind: output, shape index: {}]
  %s5 = sld [smem:[#allocation0]]
  $region26: #{bu_rumor_gcn_forward.4} parent=0
    _
  %s7 = ssub.s32 1, %s5
  %s8 = scalar_select 0, %s7, %s5
  // Predicated region
  $region2: #{bu_rumor_gcn_forward.4} parent=0 // pred_check
    _
  $region3: #{bu_rumor_gcn_forward.4} parent=0 // pred_check_branch
    %10 = sbr.rel (0) target = $region5
  $region4: #{bu_rumor_gcn_forward.4} parent=0 // pred_region
    _
  $region5: #{bu_rumor_gcn_forward.4} parent=0 // pred_fallthru
    _
  // Predicated region
  $region6: #{bu_rumor_gcn_forward.4} parent=0 // pred_check
    _
  $region7: #{bu_rumor_gcn_forward.4} parent=0 // pred_check_branch
    %12 = sbr.rel (0) target = $region9
  $region8: #{bu_rumor_gcn_forward.4} parent=0 // pred_region
    _
  $region9: #{bu_rumor_gcn_forward.4} parent=0 // pred_fallthru
    _
  // Predicated region
  $region10: #{bu_rumor_gcn_forward.4} parent=0 // pred_check
    _
  $region11: #{bu_rumor_gcn_forward.4} parent=0 // pred_check_branch
    %14 = sbr.rel (0) target = $region13
  $region12: #{bu_rumor_gcn_forward.4} parent=0 // pred_region
    _
  $region13: #{bu_rumor_gcn_forward.4} parent=0 // pred_fallthru
    _
  // Predicated region
  $region14: #{bu_rumor_gcn_forward.4} parent=0 // pred_check
    _
  $region15: #{bu_rumor_gcn_forward.4} parent=0 // pred_check_branch
    %16 = sbr.rel (0) target = $region17
  $region16: #{bu_rumor_gcn_forward.4} parent=0 // pred_region
    _
  $region17: #{bu_rumor_gcn_forward.4} parent=0 // pred_fallthru
    _
  %v18 = vld [vmem:[%s0] sm:$0xf]
  %v19 = vld [vmem:[%s0 + $0x4] sm:$0xf]
  %v20 = vld [vmem:[%s0 + $0x8] sm:$0xf]
  %v21 = vld [vmem:[%s0 + $0xc] sm:$0xf]
  %v22 = vld [vmem:[%s0 + $0x10] sm:$0xf]
  %v23 = vld [vmem:[%s0 + $0x14] sm:$0xf]
  %v24 = vld [vmem:[%s0 + $0x18] sm:$0xf]
  %v25 = vld [vmem:[%s0 + $0x1c] sm:$0xf]
  %v26 = vld [vmem:[%s0 + $0x20] sm:$0xf]
  %v27 = vld [vmem:[%s0 + $0x24] sm:$0xf]
  %v28 = vld [vmem:[%s0 + $0x28] sm:$0xf]
  %v29 = vld [vmem:[%s0 + $0x2c] sm:$0xf]
  %v30 = vld [vmem:[%s0 + $0x30] sm:$0xf]
  %v31 = vld [vmem:[%s0 + $0x34] sm:$0xf]
  %v32 = vld [vmem:[%s0 + $0x38] sm:$0xf]
  %v33 = vld [vmem:[%s0 + $0x3c] sm:$0xf]
  %v34 = vld [vmem:[%s1] sm:$0xf]
  %v35 = vld [vmem:[%s1 + $0x4] sm:$0xf]
  %v36 = vld [vmem:[%s1 + $0x8] sm:$0xf]
  %v37 = vld [vmem:[%s1 + $0xc] sm:$0xf]
  %v38 = vld [vmem:[%s1 + $0x10] sm:$0xf]
  %v39 = vld [vmem:[%s1 + $0x14] sm:$0xf]
  %v40 = vld [vmem:[%s1 + $0x18] sm:$0xf]
  %v41 = vld [vmem:[%s1 + $0x1c] sm:$0xf]
  %v42 = vld [vmem:[%s1 + $0x20] sm:$0xf]
  %v43 = vld [vmem:[%s1 + $0x24] sm:$0xf]
  %v44 = vld [vmem:[%s1 + $0x28] sm:$0xf]
  %v45 = vld [vmem:[%s1 + $0x2c] sm:$0xf]
  %v46 = vld [vmem:[%s1 + $0x30] sm:$0xf]
  %v47 = vld [vmem:[%s1 + $0x34] sm:$0xf]
  %v48 = vld [vmem:[%s1 + $0x38] sm:$0xf]
  %v49 = vld [vmem:[%s1 + $0x3c] sm:$0xf]
  %v66 = vunpack.c.l.b16 %v18
  %v67 = vunpack.c.l.b16 %v19
  %v68 = vunpack.c.l.b16 %v20
  %v69 = vunpack.c.l.b16 %v21
  %v70 = vunpack.c.l.b16 %v22
  %v71 = vunpack.c.l.b16 %v23
  %v72 = vunpack.c.l.b16 %v24
  %v73 = vunpack.c.l.b16 %v25
  %v74 = vunpack.c.l.b16 %v26
  %v75 = vunpack.c.l.b16 %v27
  %v76 = vunpack.c.l.b16 %v28
  %v77 = vunpack.c.l.b16 %v29
  %v78 = vunpack.c.l.b16 %v30
  %v79 = vunpack.c.l.b16 %v31
  %v80 = vunpack.c.l.b16 %v32
  %v81 = vunpack.c.l.b16 %v33
  %v82 = vpack.c.b16 %v67, %v66
  %v83 = vpack.c.b16 %v69, %v68
  %v84 = vpack.c.b16 %v71, %v70
  %v85 = vpack.c.b16 %v73, %v72
  %v86 = vpack.c.b16 %v75, %v74
  %v87 = vpack.c.b16 %v77, %v76
  %v88 = vpack.c.b16 %v79, %v78
  %v89 = vpack.c.b16 %v81, %v80
  %v114 = vunpack.c.l.b16 %v34
  %v115 = vunpack.c.l.b16 %v35
  %v116 = vunpack.c.l.b16 %v36
  %v117 = vunpack.c.l.b16 %v37
  %v118 = vunpack.c.l.b16 %v38
  %v119 = vunpack.c.l.b16 %v39
  %v120 = vunpack.c.l.b16 %v40
  %v121 = vunpack.c.l.b16 %v41
  %v122 = vunpack.c.l.b16 %v42
  %v123 = vunpack.c.l.b16 %v43
  %v124 = vunpack.c.l.b16 %v44
  %v125 = vunpack.c.l.b16 %v45
  %v126 = vunpack.c.l.b16 %v46
  %v127 = vunpack.c.l.b16 %v47
  %v128 = vunpack.c.l.b16 %v48
  %v129 = vunpack.c.l.b16 %v49
  %v130 = vpack.c.b16 %v115, %v114
  %v131 = vpack.c.b16 %v117, %v116
  %v132 = vpack.c.b16 %v119, %v118
  %v133 = vpack.c.b16 %v121, %v120
  %v134 = vpack.c.b16 %v123, %v122
  %v135 = vpack.c.b16 %v125, %v124
  %v136 = vpack.c.b16 %v127, %v126
  %v137 = vpack.c.b16 %v129, %v128
  %146 = vmatprep.subr.bf16.mxu0 0
  %147 = vmatpush1.bf16.msra.mxu0 %v130
  %148 = vmatprep.subr.bf16.mxu0 0
  %149 = vmatpush1.bf16.msra.mxu0 %v131
  %150 = vmatprep.subr.bf16.mxu0 0
  %151 = vmatpush1.bf16.msra.mxu0 %v132
  %152 = vmatprep.subr.bf16.mxu0 0
  %153 = vmatpush1.bf16.msra.mxu0 %v133
  %154 = vmatprep.subr.bf16.mxu0 0
  %155 = vmatpush1.bf16.msra.mxu0 %v134
  %156 = vmatprep.subr.bf16.mxu0 0
  %157 = vmatpush1.bf16.msra.mxu0 %v135
  %158 = vmatprep.subr.bf16.mxu0 0
  %159 = vmatpush1.bf16.msra.mxu0 %v136
  %160 = vmatprep.subr.bf16.mxu0 0
  %161 = vmatpush1.bf16.msra.mxu0 %v137
  %162 = vmatprep.subr.bf16.mxu0 0
  %163 = vmatpush1.bf16.msra.mxu0 0
  %164 = vmatprep.subr.bf16.mxu0 0
  %165 = vmatpush1.bf16.msra.mxu0 0
  %166 = vmatprep.subr.bf16.mxu0 0
  %167 = vmatpush1.bf16.msra.mxu0 0
  %168 = vmatprep.subr.bf16.mxu0 0
  %169 = vmatpush1.bf16.msra.mxu0 0
  %170 = vmatprep.subr.bf16.mxu0 0
  %171 = vmatpush1.bf16.msra.mxu0 0
  %172 = vmatprep.subr.bf16.mxu0 0
  %173 = vmatpush1.bf16.msra.mxu0 0
  %174 = vmatprep.subr.bf16.mxu0 0
  %175 = vmatpush1.bf16.msra.mxu0 0
  %176 = vmatprep.subr.bf16.mxu0 0
  %177 = vmatpush1.bf16.msra.mxu0 0
  %178 = vmatprep.mubr.bf16.mxu0 0
  %179 = vmatmul.mubr.bf16.gmra.mrb[0].mxu0 %v82
  %v180 = vpop.f32.mrb[0].mxu0
  %v181 = vadd.f32 0.0, %v180
  %v182 = vpop.f32.mrb[0].mxu0
  %v183 = vpop.f32.mrb[0].mxu0
  %v184 = vadd.f32 0.0, %v183
  %v185 = vpop.f32.mrb[0].mxu0
  %186 = vmatprep.mubr.bf16.mxu0 0
  %187 = vmatmul.mubr.bf16.gmra.mrb[0].mxu0 %v83
  %v188 = vpop.f32.mrb[0].mxu0
  %v189 = vadd.f32 0.0, %v188
  %v190 = vpop.f32.mrb[0].mxu0
  %v191 = vpop.f32.mrb[0].mxu0
  %v192 = vadd.f32 0.0, %v191
  %v193 = vpop.f32.mrb[0].mxu0
  %194 = vmatprep.mubr.bf16.mxu0 0
  %195 = vmatmul.mubr.bf16.gmra.mrb[0].mxu0 %v84
  %v196 = vpop.f32.mrb[0].mxu0
  %v197 = vadd.f32 0.0, %v196
  %v198 = vpop.f32.mrb[0].mxu0
  %v199 = vpop.f32.mrb[0].mxu0
  %v200 = vadd.f32 0.0, %v199
  %v201 = vpop.f32.mrb[0].mxu0
  %202 = vmatprep.mubr.bf16.mxu0 0
  %203 = vmatmul.mubr.bf16.gmra.mrb[0].mxu0 %v85
  %v204 = vpop.f32.mrb[0].mxu0
  %v205 = vadd.f32 0.0, %v204
  %v206 = vpop.f32.mrb[0].mxu0
  %v207 = vpop.f32.mrb[0].mxu0
  %v208 = vadd.f32 0.0, %v207
  %v209 = vpop.f32.mrb[0].mxu0
  %210 = vmatprep.mubr.bf16.mxu0 0
  %211 = vmatmul.mubr.bf16.gmra.mrb[0].mxu0 %v86
  %v212 = vpop.f32.mrb[0].mxu0
  %v213 = vadd.f32 0.0, %v212
  %v214 = vpop.f32.mrb[0].mxu0
  %v215 = vpop.f32.mrb[0].mxu0
  %v216 = vadd.f32 0.0, %v215
  %v217 = vpop.f32.mrb[0].mxu0
  %218 = vmatprep.mubr.bf16.mxu0 0
  %219 = vmatmul.mubr.bf16.gmra.mrb[0].mxu0 %v87
  %v220 = vpop.f32.mrb[0].mxu0
  %v221 = vadd.f32 0.0, %v220
  %v222 = vpop.f32.mrb[0].mxu0
  %v223 = vpop.f32.mrb[0].mxu0
  %v224 = vadd.f32 0.0, %v223
  %v225 = vpop.f32.mrb[0].mxu0
  %226 = vmatprep.mubr.bf16.mxu0 0
  %227 = vmatmul.mubr.bf16.gmra.mrb[0].mxu0 %v88
  %v228 = vpop.f32.mrb[0].mxu0
  %v229 = vadd.f32 0.0, %v228
  %v230 = vpop.f32.mrb[0].mxu0
  %v231 = vpop.f32.mrb[0].mxu0
  %v232 = vadd.f32 0.0, %v231
  %v233 = vpop.f32.mrb[0].mxu0
  %234 = vmatprep.mubr.bf16.mxu0 0
  %235 = vmatmul.mubr.bf16.gmra.mrb[0].mxu0 %v89
  %v236 = vpop.f32.mrb[0].mxu0
  %v237 = vadd.f32 0.0, %v236
  %v238 = vpop.f32.mrb[0].mxu0
  %v239 = vpop.f32.mrb[0].mxu0
  %v240 = vadd.f32 0.0, %v239
  %v241 = vpop.f32.mrb[0].mxu0
  %242 = vdwg.mxu0
  %v243 = vld [vmem:[%s2] sm:$0xff]
  %v244 = vld [vmem:[%s2 + $0x8] sm:$0xff]
  %v245 = vld [vmem:[%s2 + $0x10] sm:$0xff]
  %v246 = vld [vmem:[%s2 + $0x18] sm:$0xff]
  %v247 = vld [vmem:[%s2 + $0x20] sm:$0xff]
  %v248 = vld [vmem:[%s2 + $0x28] sm:$0xff]
  %v249 = vld [vmem:[%s2 + $0x30] sm:$0xff]
  %v250 = vld [vmem:[%s2 + $0x38] sm:$0xff]
  %v251 = vld [vmem:[%s2 + $0x40] sm:$0xff]
  %v252 = vld [vmem:[%s2 + $0x48] sm:$0xff]
  %v253 = vld [vmem:[%s2 + $0x50] sm:$0xff]
  %v254 = vld [vmem:[%s2 + $0x58] sm:$0xff]
  %v255 = vld [vmem:[%s2 + $0x60] sm:$0xff]
  %v256 = vld [vmem:[%s2 + $0x68] sm:$0xff]
  %v257 = vld [vmem:[%s2 + $0x70] sm:$0xff]
  %v258 = vld [vmem:[%s2 + $0x78] sm:$0xff]
  %260 = vset.pattern.permute.xlu0 0
  %261 = vperm.xlu0 %260, %v243
  %v262 = vpop.permute.xlu0 %261
  %265 = vset.pattern.permute.xlu0 0
  %266 = vperm.xlu0 %265, %v244
  %v267 = vpop.permute.xlu0 %266
  %270 = vset.pattern.permute.xlu0 0
  %271 = vperm.xlu0 %270, %v245
  %v272 = vpop.permute.xlu0 %271
  %275 = vset.pattern.permute.xlu0 0
  %276 = vperm.xlu0 %275, %v246
  %v277 = vpop.permute.xlu0 %276
  %280 = vset.pattern.permute.xlu0 0
  %281 = vperm.xlu0 %280, %v247
  %v282 = vpop.permute.xlu0 %281
  %285 = vset.pattern.permute.xlu0 0
  %286 = vperm.xlu0 %285, %v248
  %v287 = vpop.permute.xlu0 %286
  %290 = vset.pattern.permute.xlu0 0
  %291 = vperm.xlu0 %290, %v249
  %v292 = vpop.permute.xlu0 %291
  %295 = vset.pattern.permute.xlu0 0
  %296 = vperm.xlu0 %295, %v250
  %v297 = vpop.permute.xlu0 %296
  %300 = vset.pattern.permute.xlu0 0
  %301 = vperm.xlu0 %300, %v251
  %v302 = vpop.permute.xlu0 %301
  %305 = vset.pattern.permute.xlu0 0
  %306 = vperm.xlu0 %305, %v252
  %v307 = vpop.permute.xlu0 %306
  %310 = vset.pattern.permute.xlu0 0
  %311 = vperm.xlu0 %310, %v253
  %v312 = vpop.permute.xlu0 %311
  %315 = vset.pattern.permute.xlu0 0
  %316 = vperm.xlu0 %315, %v254
  %v317 = vpop.permute.xlu0 %316
  %320 = vset.pattern.permute.xlu0 0
  %321 = vperm.xlu0 %320, %v255
  %v322 = vpop.permute.xlu0 %321
  %325 = vset.pattern.permute.xlu0 0
  %326 = vperm.xlu0 %325, %v256
  %v327 = vpop.permute.xlu0 %326
  %330 = vset.pattern.permute.xlu0 0
  %331 = vperm.xlu0 %330, %v257
  %v332 = vpop.permute.xlu0 %331
  %335 = vset.pattern.permute.xlu0 0
  %336 = vperm.xlu0 %335, %v258
  %v337 = vpop.permute.xlu0 %336
  %v339 = vmul.f32 %v181, %v262
  %v340 = vmul.f32 %v184, %v267
  %v341 = vmul.f32 %v189, %v272
  %v342 = vmul.f32 %v192, %v277
  %v343 = vmul.f32 %v197, %v282
  %v344 = vmul.f32 %v200, %v287
  %v345 = vmul.f32 %v205, %v292
  %v346 = vmul.f32 %v208, %v297
  %v347 = vmul.f32 %v213, %v302
  %v348 = vmul.f32 %v216, %v307
  %v349 = vmul.f32 %v221, %v312
  %v350 = vmul.f32 %v224, %v317
  %v351 = vmul.f32 %v229, %v322
  %v352 = vmul.f32 %v232, %v327
  %v353 = vmul.f32 %v237, %v332
  %v354 = vmul.f32 %v240, %v337
  %v355 = vld [vmem:[%s3] sm:$0x1]
  %v357 = vlaneseq
  %v358 = vshrl.u32 %v357, 7
  %v359 = vsub.s32 0, %v358
  %v360 = vrot.slane %v355, %v359
  %v362 = vadd.f32 %v339, %v360
  %v363 = vadd.f32 %v340, %v360
  %v364 = vadd.f32 %v341, %v360
  %v365 = vadd.f32 %v342, %v360
  %v366 = vadd.f32 %v343, %v360
  %v367 = vadd.f32 %v344, %v360
  %v368 = vadd.f32 %v345, %v360
  %v369 = vadd.f32 %v346, %v360
  %v370 = vadd.f32 %v347, %v360
  %v371 = vadd.f32 %v348, %v360
  %v372 = vadd.f32 %v349, %v360
  %v373 = vadd.f32 %v350, %v360
  %v374 = vadd.f32 %v351, %v360
  %v375 = vadd.f32 %v352, %v360
  %v376 = vadd.f32 %v353, %v360
  %v377 = vadd.f32 %v354, %v360
  %378 = vst [vmem:[%s4] sm:$0xff] %v362
  %379 = vst [vmem:[%s4 + $0x8] sm:$0xff] %v363
  %380 = vst [vmem:[%s4 + $0x10] sm:$0xff] %v364
  %381 = vst [vmem:[%s4 + $0x18] sm:$0xff] %v365
  %382 = vst [vmem:[%s4 + $0x20] sm:$0xff] %v366
  %383 = vst [vmem:[%s4 + $0x28] sm:$0xff] %v367
  %384 = vst [vmem:[%s4 + $0x30] sm:$0xff] %v368
  %385 = vst [vmem:[%s4 + $0x38] sm:$0xff] %v369
  %386 = vst [vmem:[%s4 + $0x40] sm:$0xff] %v370
  %387 = vst [vmem:[%s4 + $0x48] sm:$0xff] %v371
  %388 = vst [vmem:[%s4 + $0x50] sm:$0xff] %v372
  %389 = vst [vmem:[%s4 + $0x58] sm:$0xff] %v373
  %390 = vst [vmem:[%s4 + $0x60] sm:$0xff] %v374
  %391 = vst [vmem:[%s4 + $0x68] sm:$0xff] %v375
  %392 = vst [vmem:[%s4 + $0x70] sm:$0xff] %v376
  %393 = vst [vmem:[%s4 + $0x78] sm:$0xff] %v377
  // Predicated region
  $region18: #{bu_rumor_gcn_forward.4} parent=0 // pred_check
    _
  $region19: #{bu_rumor_gcn_forward.4} parent=0 // pred_check_branch
    %395 = sbr.rel (0) target = $region21
  $region20: #{bu_rumor_gcn_forward.4} parent=0 // pred_region
    _
  $region21: #{bu_rumor_gcn_forward.4} parent=0 // pred_fallthru
    _
  // Predicated region
  $region22: #{bu_rumor_gcn_forward.4} parent=0 // pred_check
    _
  $region23: #{bu_rumor_gcn_forward.4} parent=0 // pred_check_branch
    %397 = sbr.rel (0) target = $region25
  $region24: #{bu_rumor_gcn_forward.4} parent=0 // pred_region
    _
  $region25: #{bu_rumor_gcn_forward.4} parent=0 // pred_fallthru
    _

// kernel: bu_rumor_gcn_forward.5
$region0: #{bu_rumor_gcn_forward.5}
  #allocation0 [shape = 'u32[]', space=smem, size = 0x4, offset = 0x4, fixed_abs, tag = 'smem constant byte address 0x4 - core index']
  #allocation1 [shape = 'u32[144,128]{1,0:T(1,128)}', space=vmem, size = 0x12000, scoped, tag = 'internal scratch']
  %s0 = inlined_call_operand.vmem [shape: f32[128,128], index: 0, kind: input, shape index: {}]
  %s1 = inlined_call_operand.vmem [shape: f32[128,1], index: 1, kind: input, shape index: {}]
  %s2 = inlined_call_operand.vmem [shape: f32[1,128], index: 2, kind: input, shape index: {}]
  %s3 = inlined_call_operand.vmem [shape: bf16[128,128], index: 3, kind: output, shape index: {}]
  %s4 = sld [smem:[#allocation0]]
  $region22: #{bu_rumor_gcn_forward.5} parent=0
    _
  %s6 = ssub.s32 1, %s4
  %s7 = scalar_select 0, %s6, %s4
  // Predicated region
  $region2: #{bu_rumor_gcn_forward.5} parent=0 // pred_check
    _
  $region3: #{bu_rumor_gcn_forward.5} parent=0 // pred_check_branch
    %9 = sbr.rel (0) target = $region5
  $region4: #{bu_rumor_gcn_forward.5} parent=0 // pred_region
    _
  $region5: #{bu_rumor_gcn_forward.5} parent=0 // pred_fallthru
    _
  // Predicated region
  $region6: #{bu_rumor_gcn_forward.5} parent=0 // pred_check
    _
  $region7: #{bu_rumor_gcn_forward.5} parent=0 // pred_check_branch
    %11 = sbr.rel (0) target = $region9
  $region8: #{bu_rumor_gcn_forward.5} parent=0 // pred_region
    _
  $region9: #{bu_rumor_gcn_forward.5} parent=0 // pred_fallthru
    _
  // Predicated region
  $region10: #{bu_rumor_gcn_forward.5} parent=0 // pred_check
    _
  $region11: #{bu_rumor_gcn_forward.5} parent=0 // pred_check_branch
    %13 = sbr.rel (0) target = $region13
  $region12: #{bu_rumor_gcn_forward.5} parent=0 // pred_region
    _
  $region13: #{bu_rumor_gcn_forward.5} parent=0 // pred_fallthru
    _
  %v14 = vld [vmem:[%s0] sm:$0xff]
  %v15 = vld [vmem:[%s0 + $0x8] sm:$0xff]
  %v16 = vld [vmem:[%s0 + $0x10] sm:$0xff]
  %v17 = vld [vmem:[%s0 + $0x18] sm:$0xff]
  %v18 = vld [vmem:[%s0 + $0x20] sm:$0xff]
  %v19 = vld [vmem:[%s0 + $0x28] sm:$0xff]
  %v20 = vld [vmem:[%s0 + $0x30] sm:$0xff]
  %v21 = vld [vmem:[%s0 + $0x38] sm:$0xff]
  %v22 = vld [vmem:[%s0 + $0x40] sm:$0xff]
  %v23 = vld [vmem:[%s0 + $0x48] sm:$0xff]
  %v24 = vld [vmem:[%s0 + $0x50] sm:$0xff]
  %v25 = vld [vmem:[%s0 + $0x58] sm:$0xff]
  %v26 = vld [vmem:[%s0 + $0x60] sm:$0xff]
  %v27 = vld [vmem:[%s0 + $0x68] sm:$0xff]
  %v28 = vld [vmem:[%s0 + $0x70] sm:$0xff]
  %v29 = vld [vmem:[%s0 + $0x78] sm:$0xff]
  %v30 = vld [vmem:[%s1] sm:$0xff]
  %v31 = vld [vmem:[%s1 + $0x8] sm:$0xff]
  %v32 = vld [vmem:[%s1 + $0x10] sm:$0xff]
  %v33 = vld [vmem:[%s1 + $0x18] sm:$0xff]
  %v34 = vld [vmem:[%s1 + $0x20] sm:$0xff]
  %v35 = vld [vmem:[%s1 + $0x28] sm:$0xff]
  %v36 = vld [vmem:[%s1 + $0x30] sm:$0xff]
  %v37 = vld [vmem:[%s1 + $0x38] sm:$0xff]
  %v38 = vld [vmem:[%s1 + $0x40] sm:$0xff]
  %v39 = vld [vmem:[%s1 + $0x48] sm:$0xff]
  %v40 = vld [vmem:[%s1 + $0x50] sm:$0xff]
  %v41 = vld [vmem:[%s1 + $0x58] sm:$0xff]
  %v42 = vld [vmem:[%s1 + $0x60] sm:$0xff]
  %v43 = vld [vmem:[%s1 + $0x68] sm:$0xff]
  %v44 = vld [vmem:[%s1 + $0x70] sm:$0xff]
  %v45 = vld [vmem:[%s1 + $0x78] sm:$0xff]
  %47 = vset.pattern.permute.xlu0 0
  %48 = vperm.xlu0 %47, %v30
  %v49 = vpop.permute.xlu0 %48
  %52 = vset.pattern.permute.xlu0 0
  %53 = vperm.xlu0 %52, %v31
  %v54 = vpop.permute.xlu0 %53
  %57 = vset.pattern.permute.xlu0 0
  %58 = vperm.xlu0 %57, %v32
  %v59 = vpop.permute.xlu0 %58
  %62 = vset.pattern.permute.xlu0 0
  %63 = vperm.xlu0 %62, %v33
  %v64 = vpop.permute.xlu0 %63
  %67 = vset.pattern.permute.xlu0 0
  %68 = vperm.xlu0 %67, %v34
  %v69 = vpop.permute.xlu0 %68
  %72 = vset.pattern.permute.xlu0 0
  %73 = vperm.xlu0 %72, %v35
  %v74 = vpop.permute.xlu0 %73
  %77 = vset.pattern.permute.xlu0 0
  %78 = vperm.xlu0 %77, %v36
  %v79 = vpop.permute.xlu0 %78
  %82 = vset.pattern.permute.xlu0 0
  %83 = vperm.xlu0 %82, %v37
  %v84 = vpop.permute.xlu0 %83
  %87 = vset.pattern.permute.xlu0 0
  %88 = vperm.xlu0 %87, %v38
  %v89 = vpop.permute.xlu0 %88
  %92 = vset.pattern.permute.xlu0 0
  %93 = vperm.xlu0 %92, %v39
  %v94 = vpop.permute.xlu0 %93
  %97 = vset.pattern.permute.xlu0 0
  %98 = vperm.xlu0 %97, %v40
  %v99 = vpop.permute.xlu0 %98
  %102 = vset.pattern.permute.xlu0 0
  %103 = vperm.xlu0 %102, %v41
  %v104 = vpop.permute.xlu0 %103
  %107 = vset.pattern.permute.xlu0 0
  %108 = vperm.xlu0 %107, %v42
  %v109 = vpop.permute.xlu0 %108
  %112 = vset.pattern.permute.xlu0 0
  %113 = vperm.xlu0 %112, %v43
  %v114 = vpop.permute.xlu0 %113
  %117 = vset.pattern.permute.xlu0 0
  %118 = vperm.xlu0 %117, %v44
  %v119 = vpop.permute.xlu0 %118
  %122 = vset.pattern.permute.xlu0 0
  %123 = vperm.xlu0 %122, %v45
  %v124 = vpop.permute.xlu0 %123
  %v126 = vmul.f32 %v14, %v49
  %v127 = vmul.f32 %v15, %v54
  %v128 = vmul.f32 %v16, %v59
  %v129 = vmul.f32 %v17, %v64
  %v130 = vmul.f32 %v18, %v69
  %v131 = vmul.f32 %v19, %v74
  %v132 = vmul.f32 %v20, %v79
  %v133 = vmul.f32 %v21, %v84
  %v134 = vmul.f32 %v22, %v89
  %v135 = vmul.f32 %v23, %v94
  %v136 = vmul.f32 %v24, %v99
  %v137 = vmul.f32 %v25, %v104
  %v138 = vmul.f32 %v26, %v109
  %v139 = vmul.f32 %v27, %v114
  %v140 = vmul.f32 %v28, %v119
  %v141 = vmul.f32 %v29, %v124
  %v142 = vld [vmem:[%s2] sm:$0x1]
  %v144 = vlaneseq
  %v145 = vshrl.u32 %v144, 7
  %v146 = vsub.s32 0, %v145
  %v147 = vrot.slane %v142, %v146
  %v149 = vadd.f32 %v126, %v147
  %v150 = vadd.f32 %v127, %v147
  %v151 = vadd.f32 %v128, %v147
  %v152 = vadd.f32 %v129, %v147
  %v153 = vadd.f32 %v130, %v147
  %v154 = vadd.f32 %v131, %v147
  %v155 = vadd.f32 %v132, %v147
  %v156 = vadd.f32 %v133, %v147
  %v157 = vadd.f32 %v134, %v147
  %v158 = vadd.f32 %v135, %v147
  %v159 = vadd.f32 %v136, %v147
  %v160 = vadd.f32 %v137, %v147
  %v161 = vadd.f32 %v138, %v147
  %v162 = vadd.f32 %v139, %v147
  %v163 = vadd.f32 %v140, %v147
  %v164 = vadd.f32 %v141, %v147
  %v165 = vmax.f32 %v149, 0.0
  %v166 = vmax.f32 %v150, 0.0
  %v167 = vmax.f32 %v151, 0.0
  %v168 = vmax.f32 %v152, 0.0
  %v169 = vmax.f32 %v153, 0.0
  %v170 = vmax.f32 %v154, 0.0
  %v171 = vmax.f32 %v155, 0.0
  %v172 = vmax.f32 %v156, 0.0
  %v173 = vmax.f32 %v157, 0.0
  %v174 = vmax.f32 %v158, 0.0
  %v175 = vmax.f32 %v159, 0.0
  %v176 = vmax.f32 %v160, 0.0
  %v177 = vmax.f32 %v161, 0.0
  %v178 = vmax.f32 %v162, 0.0
  %v179 = vmax.f32 %v163, 0.0
  %v180 = vmax.f32 %v164, 0.0
  %v181 = vpack.c.bf16 %v166, %v165
  %v182 = vpack.c.bf16 %v168, %v167
  %v183 = vpack.c.bf16 %v170, %v169
  %v184 = vpack.c.bf16 %v172, %v171
  %v185 = vpack.c.bf16 %v174, %v173
  %v186 = vpack.c.bf16 %v176, %v175
  %v187 = vpack.c.bf16 %v178, %v177
  %v188 = vpack.c.bf16 %v180, %v179
  %v197 = vunpack.c.l.b16 %v181
  %v198 = vunpack.c.h.b16 %v181
  %v199 = vunpack.c.l.b16 %v182
  %v200 = vunpack.c.h.b16 %v182
  %v201 = vunpack.c.l.b16 %v183
  %v202 = vunpack.c.h.b16 %v183
  %v203 = vunpack.c.l.b16 %v184
  %v204 = vunpack.c.h.b16 %v184
  %v205 = vunpack.c.l.b16 %v185
  %v206 = vunpack.c.h.b16 %v185
  %v207 = vunpack.c.l.b16 %v186
  %v208 = vunpack.c.h.b16 %v186
  %v209 = vunpack.c.l.b16 %v187
  %v210 = vunpack.c.h.b16 %v187
  %v211 = vunpack.c.l.b16 %v188
  %v212 = vunpack.c.h.b16 %v188
  %v213 = vpack.c.b16 %v197, %v197
  %v214 = vpack.c.b16 %v198, %v198
  %v215 = vpack.c.b16 %v199, %v199
  %v216 = vpack.c.b16 %v200, %v200
  %v217 = vpack.c.b16 %v201, %v201
  %v218 = vpack.c.b16 %v202, %v202
  %v219 = vpack.c.b16 %v203, %v203
  %v220 = vpack.c.b16 %v204, %v204
  %v221 = vpack.c.b16 %v205, %v205
  %v222 = vpack.c.b16 %v206, %v206
  %v223 = vpack.c.b16 %v207, %v207
  %v224 = vpack.c.b16 %v208, %v208
  %v225 = vpack.c.b16 %v209, %v209
  %v226 = vpack.c.b16 %v210, %v210
  %v227 = vpack.c.b16 %v211, %v211
  %v228 = vpack.c.b16 %v212, %v212
  %245 = vst [vmem:[%s3] sm:$0xf] %v213
  %246 = vst [vmem:[%s3 + $0x4] sm:$0xf] %v214
  %247 = vst [vmem:[%s3 + $0x8] sm:$0xf] %v215
  %248 = vst [vmem:[%s3 + $0xc] sm:$0xf] %v216
  %249 = vst [vmem:[%s3 + $0x10] sm:$0xf] %v217
  %250 = vst [vmem:[%s3 + $0x14] sm:$0xf] %v218
  %251 = vst [vmem:[%s3 + $0x18] sm:$0xf] %v219
  %252 = vst [vmem:[%s3 + $0x1c] sm:$0xf] %v220
  %253 = vst [vmem:[%s3 + $0x20] sm:$0xf] %v221
  %254 = vst [vmem:[%s3 + $0x24] sm:$0xf] %v222
  %255 = vst [vmem:[%s3 + $0x28] sm:$0xf] %v223
  %256 = vst [vmem:[%s3 + $0x2c] sm:$0xf] %v224
  %257 = vst [vmem:[%s3 + $0x30] sm:$0xf] %v225
  %258 = vst [vmem:[%s3 + $0x34] sm:$0xf] %v226
  %259 = vst [vmem:[%s3 + $0x38] sm:$0xf] %v227
  %260 = vst [vmem:[%s3 + $0x3c] sm:$0xf] %v228
  // Predicated region
  $region14: #{bu_rumor_gcn_forward.5} parent=0 // pred_check
    _
  $region15: #{bu_rumor_gcn_forward.5} parent=0 // pred_check_branch
    %262 = sbr.rel (0) target = $region17
  $region16: #{bu_rumor_gcn_forward.5} parent=0 // pred_region
    _
  $region17: #{bu_rumor_gcn_forward.5} parent=0 // pred_fallthru
    _
  // Predicated region
  $region18: #{bu_rumor_gcn_forward.5} parent=0 // pred_check
    _
  $region19: #{bu_rumor_gcn_forward.5} parent=0 // pred_check_branch
    %264 = sbr.rel (0) target = $region21
  $region20: #{bu_rumor_gcn_forward.5} parent=0 // pred_region
    _
  $region21: #{bu_rumor_gcn_forward.5} parent=0 // pred_fallthru
    _

// kernel: bu_rumor_gcn_forward.7
$region0: #{bu_rumor_gcn_forward.7}
  #allocation0 [shape = 'u32[]', space=smem, size = 0x4, offset = 0x4, fixed_abs, tag = 'smem constant byte address 0x4 - core index']
  #allocation1 [shape = 'u32[144,128]{1,0:T(1,128)}', space=vmem, size = 0x12000, scoped, tag = 'internal scratch']
  %s0 = inlined_call_operand.vmem [shape: f32[128,128], index: 0, kind: input, shape index: {}]
  %s1 = inlined_call_operand.vmem [shape: f32[128,1], index: 1, kind: input, shape index: {}]
  %s2 = inlined_call_operand.vmem [shape: f32[1,128], index: 2, kind: input, shape index: {}]
  %s3 = inlined_call_operand.vmem [shape: f32[128,128], index: 3, kind: output, shape index: {}]
  %s4 = sld [smem:[#allocation0]]
  $region22: #{bu_rumor_gcn_forward.7} parent=0
    _
  %s6 = ssub.s32 1, %s4
  %s7 = scalar_select 0, %s6, %s4
  // Predicated region
  $region2: #{bu_rumor_gcn_forward.7} parent=0 // pred_check
    _
  $region3: #{bu_rumor_gcn_forward.7} parent=0 // pred_check_branch
    %9 = sbr.rel (0) target = $region5
  $region4: #{bu_rumor_gcn_forward.7} parent=0 // pred_region
    _
  $region5: #{bu_rumor_gcn_forward.7} parent=0 // pred_fallthru
    _
  // Predicated region
  $region6: #{bu_rumor_gcn_forward.7} parent=0 // pred_check
    _
  $region7: #{bu_rumor_gcn_forward.7} parent=0 // pred_check_branch
    %11 = sbr.rel (0) target = $region9
  $region8: #{bu_rumor_gcn_forward.7} parent=0 // pred_region
    _
  $region9: #{bu_rumor_gcn_forward.7} parent=0 // pred_fallthru
    _
  // Predicated region
  $region10: #{bu_rumor_gcn_forward.7} parent=0 // pred_check
    _
  $region11: #{bu_rumor_gcn_forward.7} parent=0 // pred_check_branch
    %13 = sbr.rel (0) target = $region13
  $region12: #{bu_rumor_gcn_forward.7} parent=0 // pred_region
    _
  $region13: #{bu_rumor_gcn_forward.7} parent=0 // pred_fallthru
    _
  %v14 = vld [vmem:[%s0] sm:$0xff]
  %v15 = vld [vmem:[%s0 + $0x8] sm:$0xff]
  %v16 = vld [vmem:[%s0 + $0x10] sm:$0xff]
  %v17 = vld [vmem:[%s0 + $0x18] sm:$0xff]
  %v18 = vld [vmem:[%s0 + $0x20] sm:$0xff]
  %v19 = vld [vmem:[%s0 + $0x28] sm:$0xff]
  %v20 = vld [vmem:[%s0 + $0x30] sm:$0xff]
  %v21 = vld [vmem:[%s0 + $0x38] sm:$0xff]
  %v22 = vld [vmem:[%s0 + $0x40] sm:$0xff]
  %v23 = vld [vmem:[%s0 + $0x48] sm:$0xff]
  %v24 = vld [vmem:[%s0 + $0x50] sm:$0xff]
  %v25 = vld [vmem:[%s0 + $0x58] sm:$0xff]
  %v26 = vld [vmem:[%s0 + $0x60] sm:$0xff]
  %v27 = vld [vmem:[%s0 + $0x68] sm:$0xff]
  %v28 = vld [vmem:[%s0 + $0x70] sm:$0xff]
  %v29 = vld [vmem:[%s0 + $0x78] sm:$0xff]
  %v30 = vld [vmem:[%s1] sm:$0xff]
  %v31 = vld [vmem:[%s1 + $0x8] sm:$0xff]
  %v32 = vld [vmem:[%s1 + $0x10] sm:$0xff]
  %v33 = vld [vmem:[%s1 + $0x18] sm:$0xff]
  %v34 = vld [vmem:[%s1 + $0x20] sm:$0xff]
  %v35 = vld [vmem:[%s1 + $0x28] sm:$0xff]
  %v36 = vld [vmem:[%s1 + $0x30] sm:$0xff]
  %v37 = vld [vmem:[%s1 + $0x38] sm:$0xff]
  %v38 = vld [vmem:[%s1 + $0x40] sm:$0xff]
  %v39 = vld [vmem:[%s1 + $0x48] sm:$0xff]
  %v40 = vld [vmem:[%s1 + $0x50] sm:$0xff]
  %v41 = vld [vmem:[%s1 + $0x58] sm:$0xff]
  %v42 = vld [vmem:[%s1 + $0x60] sm:$0xff]
  %v43 = vld [vmem:[%s1 + $0x68] sm:$0xff]
  %v44 = vld [vmem:[%s1 + $0x70] sm:$0xff]
  %v45 = vld [vmem:[%s1 + $0x78] sm:$0xff]
  %47 = vset.pattern.permute.xlu0 0
  %48 = vperm.xlu0 %47, %v30
  %v49 = vpop.permute.xlu0 %48
  %52 = vset.pattern.permute.xlu0 0
  %53 = vperm.xlu0 %52, %v31
  %v54 = vpop.permute.xlu0 %53
  %57 = vset.pattern.permute.xlu0 0
  %58 = vperm.xlu0 %57, %v32
  %v59 = vpop.permute.xlu0 %58
  %62 = vset.pattern.permute.xlu0 0
  %63 = vperm.xlu0 %62, %v33
  %v64 = vpop.permute.xlu0 %63
  %67 = vset.pattern.permute.xlu0 0
  %68 = vperm.xlu0 %67, %v34
  %v69 = vpop.permute.xlu0 %68
  %72 = vset.pattern.permute.xlu0 0
  %73 = vperm.xlu0 %72, %v35
  %v74 = vpop.permute.xlu0 %73
  %77 = vset.pattern.permute.xlu0 0
  %78 = vperm.xlu0 %77, %v36
  %v79 = vpop.permute.xlu0 %78
  %82 = vset.pattern.permute.xlu0 0
  %83 = vperm.xlu0 %82, %v37
  %v84 = vpop.permute.xlu0 %83
  %87 = vset.pattern.permute.xlu0 0
  %88 = vperm.xlu0 %87, %v38
  %v89 = vpop.permute.xlu0 %88
  %92 = vset.pattern.permute.xlu0 0
  %93 = vperm.xlu0 %92, %v39
  %v94 = vpop.permute.xlu0 %93
  %97 = vset.pattern.permute.xlu0 0
  %98 = vperm.xlu0 %97, %v40
  %v99 = vpop.permute.xlu0 %98
  %102 = vset.pattern.permute.xlu0 0
  %103 = vperm.xlu0 %102, %v41
  %v104 = vpop.permute.xlu0 %103
  %107 = vset.pattern.permute.xlu0 0
  %108 = vperm.xlu0 %107, %v42
  %v109 = vpop.permute.xlu0 %108
  %112 = vset.pattern.permute.xlu0 0
  %113 = vperm.xlu0 %112, %v43
  %v114 = vpop.permute.xlu0 %113
  %117 = vset.pattern.permute.xlu0 0
  %118 = vperm.xlu0 %117, %v44
  %v119 = vpop.permute.xlu0 %118
  %122 = vset.pattern.permute.xlu0 0
  %123 = vperm.xlu0 %122, %v45
  %v124 = vpop.permute.xlu0 %123
  %v126 = vmul.f32 %v14, %v49
  %v127 = vmul.f32 %v15, %v54
  %v128 = vmul.f32 %v16, %v59
  %v129 = vmul.f32 %v17, %v64
  %v130 = vmul.f32 %v18, %v69
  %v131 = vmul.f32 %v19, %v74
  %v132 = vmul.f32 %v20, %v79
  %v133 = vmul.f32 %v21, %v84
  %v134 = vmul.f32 %v22, %v89
  %v135 = vmul.f32 %v23, %v94
  %v136 = vmul.f32 %v24, %v99
  %v137 = vmul.f32 %v25, %v104
  %v138 = vmul.f32 %v26, %v109
  %v139 = vmul.f32 %v27, %v114
  %v140 = vmul.f32 %v28, %v119
  %v141 = vmul.f32 %v29, %v124
  %v142 = vld [vmem:[%s2] sm:$0x1]
  %v144 = vlaneseq
  %v145 = vshrl.u32 %v144, 7
  %v146 = vsub.s32 0, %v145
  %v147 = vrot.slane %v142, %v146
  %v149 = vadd.f32 %v126, %v147
  %v150 = vadd.f32 %v127, %v147
  %v151 = vadd.f32 %v128, %v147
  %v152 = vadd.f32 %v129, %v147
  %v153 = vadd.f32 %v130, %v147
  %v154 = vadd.f32 %v131, %v147
  %v155 = vadd.f32 %v132, %v147
  %v156 = vadd.f32 %v133, %v147
  %v157 = vadd.f32 %v134, %v147
  %v158 = vadd.f32 %v135, %v147
  %v159 = vadd.f32 %v136, %v147
  %v160 = vadd.f32 %v137, %v147
  %v161 = vadd.f32 %v138, %v147
  %v162 = vadd.f32 %v139, %v147
  %v163 = vadd.f32 %v140, %v147
  %v164 = vadd.f32 %v141, %v147
  %v165 = vmax.f32 %v149, 0.0
  %v166 = vmax.f32 %v150, 0.0
  %v167 = vmax.f32 %v151, 0.0
  %v168 = vmax.f32 %v152, 0.0
  %v169 = vmax.f32 %v153, 0.0
  %v170 = vmax.f32 %v154, 0.0
  %v171 = vmax.f32 %v155, 0.0
  %v172 = vmax.f32 %v156, 0.0
  %v173 = vmax.f32 %v157, 0.0
  %v174 = vmax.f32 %v158, 0.0
  %v175 = vmax.f32 %v159, 0.0
  %v176 = vmax.f32 %v160, 0.0
  %v177 = vmax.f32 %v161, 0.0
  %v178 = vmax.f32 %v162, 0.0
  %v179 = vmax.f32 %v163, 0.0
  %v180 = vmax.f32 %v164, 0.0
  %181 = vst [vmem:[%s3] sm:$0xff] %v165
  %182 = vst [vmem:[%s3 + $0x8] sm:$0xff] %v166
  %183 = vst [vmem:[%s3 + $0x10] sm:$0xff] %v167
  %184 = vst [vmem:[%s3 + $0x18] sm:$0xff] %v168
  %185 = vst [vmem:[%s3 + $0x20] sm:$0xff] %v169
  %186 = vst [vmem:[%s3 + $0x28] sm:$0xff] %v170
  %187 = vst [vmem:[%s3 + $0x30] sm:$0xff] %v171
  %188 = vst [vmem:[%s3 + $0x38] sm:$0xff] %v172
  %189 = vst [vmem:[%s3 + $0x40] sm:$0xff] %v173
  %190 = vst [vmem:[%s3 + $0x48] sm:$0xff] %v174
  %191 = vst [vmem:[%s3 + $0x50] sm:$0xff] %v175
  %192 = vst [vmem:[%s3 + $0x58] sm:$0xff] %v176
  %193 = vst [vmem:[%s3 + $0x60] sm:$0xff] %v177
  %194 = vst [vmem:[%s3 + $0x68] sm:$0xff] %v178
  %195 = vst [vmem:[%s3 + $0x70] sm:$0xff] %v179
  %196 = vst [vmem:[%s3 + $0x78] sm:$0xff] %v180
  // Predicated region
  $region14: #{bu_rumor_gcn_forward.7} parent=0 // pred_check
    _
  $region15: #{bu_rumor_gcn_forward.7} parent=0 // pred_check_branch
    %198 = sbr.rel (0) target = $region17
  $region16: #{bu_rumor_gcn_forward.7} parent=0 // pred_region
    _
  $region17: #{bu_rumor_gcn_forward.7} parent=0 // pred_fallthru
    _
  // Predicated region
  $region18: #{bu_rumor_gcn_forward.7} parent=0 // pred_check
    _
  $region19: #{bu_rumor_gcn_forward.7} parent=0 // pred_check_branch
    %200 = sbr.rel (0) target = $region21
  $region20: #{bu_rumor_gcn_forward.7} parent=0 // pred_region
    _
  $region21: #{bu_rumor_gcn_forward.7} parent=0 // pred_fallthru
    _

</llo_original>
